<compile_context>
chip_gen: v5e
topology: v5e:2x2
jax: 0.10.0
libtpu: 0.0.40
codegen_flags: <defaults>
</compile_context>

<pallas_src>
import functools

import jax
import jax.numpy as jnp
from jax.experimental import pallas as pl
from jax.experimental.pallas import tpu as pltpu

K = 3  # 3x3 convs, stride 1, "SAME" zero padding


def _shortcut_kernel(x_ref, m_ref, w1_ref, b1_ref, w2_ref, b2_ref,
                     out_ref, fea2_ref, stack_ref, *, W, cin, cmid):
    """One block of `nb` whole images per grid step, flattened on the lane axis.

    x_ref    : (1, Cin,  L)       f32  input block (channels on sublanes, L = nb*H*W padded)
    m_ref    : (9, L)             f32  0/1 edge masks, one row per 3x3 tap
    w1_ref   : (Cmid, 9*Cin)      bf16 conv1 weights, im2col-repacked
    b1_ref   : (Cmid, 1)          f32
    w2_ref   : (Cout, 9*Cmid)     bf16 conv2 weights, im2col-repacked
    b2_ref   : (Cout, 1)          f32
    out_ref  : (1, Cout, L)            x[0] + conv2(relu(conv1(x[0])))
    fea2_ref : (1, Cmid, L)            relu(conv1(x[0]))
    stack_ref: (9*max(Cin,Cmid), L) bf16 scratch holding the im2col tap stack
    """
    L = x_ref.shape[-1]
    # Lane shift of tap (dy, dx) on the flattened image: output pixel p reads p+s.
    shifts = [(dy - 1) * W + (dx - 1) for dy in range(K) for dx in range(K)]

    def conv3x3(src_f32, c_in, w_ref, b_ref):
        # Build the im2col stack: 9 masked XLU lane rotations of the source,
        # stacked on the contraction axis, then ONE bf16 MXU matmul (f32 acc).
        for t, s in enumerate(shifts):
            rolled = src_f32 if s == 0 else pltpu.roll(src_f32, shift=(-s) % L, axis=1)
            tap = rolled * m_ref[pl.ds(t, 1), :]   # zero taps that leave the image
            stack_ref[pl.ds(t * c_in, c_in), :] = tap.astype(jnp.bfloat16)
        acc = jnp.dot(w_ref[...], stack_ref[pl.ds(0, K * K * c_in), :],
                      preferred_element_type=jnp.float32)
        return acc + b_ref[...]                    # f32 bias add

    hid = jnp.maximum(conv3x3(x_ref[0], cin, w1_ref, b1_ref), 0.0)   # (Cmid, L) f32
    fea2_ref[0] = hid.astype(fea2_ref.dtype)
    fea1 = conv3x3(hid, cmid, w2_ref, b2_ref)                        # (Cout, L) f32
    # Re-read x from the VMEM-resident block (bounds its live range).
    out_ref[0] = (x_ref[0] + fea1).astype(out_ref.dtype)


def _images_per_step(n, hw):
    """Images folded onto the lane axis per grid step: aim for lane width >= 512
    while keeping >= 2 grid steps when N >= 2 (both v7x TensorCores get work)."""
    best = 1
    for nb in range(1, n + 1):
        if n % nb:
            continue
        if n >= 2 and (n // nb) < 2:
            break
        best = nb
        if nb * hw >= 512:
            break
    return best


def shortcut_block_with2return(x, w1, b1, w2, b2):
    """x: tensor, or tuple/list whose first element is (N, C, H, W) float32.

    Returns (output, fea2): output (N, C, H, W), fea2 (N, Cmid, H, W).
    """
    x0 = x[0] if isinstance(x, (tuple, list)) else x
    N, C, H, W = x0.shape
    Cmid = w1.shape[-1]
    Cout = w2.shape[-1]
    assert w1.shape == (K, K, C, Cmid) and w2.shape == (K, K, Cmid, Cout)
    assert Cout == C, "residual add requires sub(x) to preserve channels"
    HW = H * W

    nb = _images_per_step(N, HW)      # images per grid step
    G = N // nb                       # grid steps (>= 2 when N >= 2)
    L = nb * HW                       # valid lanes per step
    Lp = ((L + 127) // 128) * 128     # lane-dense stores: pad lane axis to 128

    # Layout: (grid, C, nb*HW) -- channels on sublanes, flattened spatial (plus
    # the folded sub-batch) on the 128-lane axis.  For nb == 1 this is a free
    # reshape (the transpose is over a size-1 axis).
    x_flat = x0.reshape(G, nb, C, HW).transpose(0, 2, 1, 3).reshape(G, C, L)
    if Lp != L:
        x_flat = jnp.pad(x_flat, ((0, 0), (0, 0), (0, Lp - L)))

    # Edge masks, built once per call (identical for every grid step): tap
    # (dy, dx) of output pixel (y, x) reads source (y+dy-1, x+dx-1); zero it when
    # the source falls outside the image (or the lane is end-of-block padding).
    p = jnp.arange(Lp)
    q = p % HW
    yy, xx = q // W, q % W
    in_img = p < L
    mask = jnp.stack(
        [(in_img
          & (yy + dy - 1 >= 0) & (yy + dy - 1 < H)
          & (xx + dx - 1 >= 0) & (xx + dx - 1 < W))
         for dy in range(K) for dx in range(K)],
        axis=0).astype(jnp.float32)                                   # (9, Lp)

    # One-off im2col weight repack (HWIO -> (Cout, 9*Cin)); bf16 MXU operands.
    w1_r = w1.reshape(K * K * C, Cmid).T.astype(jnp.bfloat16)         # (Cmid, 9*C)
    w2_r = w2.reshape(K * K * Cmid, Cout).T.astype(jnp.bfloat16)      # (Cout, 9*Cmid)
    b1_2d = b1.reshape(Cmid, 1).astype(jnp.float32)
    b2_2d = b2.reshape(Cout, 1).astype(jnp.float32)

    kernel = functools.partial(_shortcut_kernel, W=W, cin=C, cmid=Cmid)
    cmax = max(C, Cmid)

    out_flat, fea2_flat = pl.pallas_call(
        kernel,
        out_shape=(
            jax.ShapeDtypeStruct((G, Cout, Lp), x0.dtype),
            jax.ShapeDtypeStruct((G, Cmid, Lp), x0.dtype),
        ),
        grid_spec=pltpu.PrefetchScalarGridSpec(
            num_scalar_prefetch=0,
            grid=(G,),
            in_specs=[
                pl.BlockSpec((1, C, Lp), lambda i: (i, 0, 0)),
                # Constant-index blocks below are DMA'd once and stay resident;
                # they are tiny (a few KiB), so we skip single-buffering them.
                pl.BlockSpec((K * K, Lp), lambda i: (0, 0)),
                pl.BlockSpec((Cmid, K * K * C), lambda i: (0, 0)),
                pl.BlockSpec((Cmid, 1), lambda i: (0, 0)),
                pl.BlockSpec((Cout, K * K * Cmid), lambda i: (0, 0)),
                pl.BlockSpec((Cout, 1), lambda i: (0, 0)),
            ],
            out_specs=[
                pl.BlockSpec((1, Cout, Lp), lambda i: (i, 0, 0)),
                pl.BlockSpec((1, Cmid, Lp), lambda i: (i, 0, 0)),
            ],
            scratch_shapes=[pltpu.VMEM((K * K * cmax, Lp), jnp.bfloat16)],
        ),
        compiler_params=pltpu.CompilerParams(
            dimension_semantics=("parallel",),
            vmem_limit_bytes=32 * 1024 * 1024,
        ),
    )(x_flat, mask, w1_r, b1_2d, w2_r, b2_2d)

    def unpack(a, c):
        a = a[:, :, :L].reshape(G, c, nb, HW).transpose(0, 2, 1, 3)
        return a.reshape(N, c, H, W)

    return unpack(out_flat, Cout), unpack(fea2_flat, Cmid)


def _reference(x0, w1, b1, w2, b2):
    """Plain-JAX reference with the kernel's numerical contract:
    bf16 matmul operands, f32 accumulation, f32 bias / ReLU / residual add."""
    def conv(inp, w, b):
        y = jax.lax.conv_general_dilated(
            inp.astype(jnp.bfloat16), w.astype(jnp.bfloat16),
            window_strides=(1, 1), padding="SAME",
            dimension_numbers=("NCHW", "HWIO", "NCHW"),
            preferred_element_type=jnp.float32)
        return y + b.reshape(1, -1, 1, 1)

    fea2 = jax.nn.relu(conv(x0, w1, b1))
    fea1 = conv(fea2, w2, b2)
    return x0 + fea1, fea2


if __name__ == "__main__":
    N, C, H, W = 2, 4, 16, 16
    Cmid = 4

    key = jax.random.PRNGKey(0)
    kx, k1, k2, k3, k4 = jax.random.split(key, 5)
    x = jax.random.normal(kx, (N, C, H, W), dtype=jnp.float32)
    # Deterministic synthetic params (HWIO conv weights + biases).
    w1 = 0.1 * jax.random.normal(k1, (K, K, C, Cmid), dtype=jnp.float32)
    b1 = 0.05 * jax.random.normal(k2, (Cmid,), dtype=jnp.float32)
    w2 = 0.1 * jax.random.normal(k3, (K, K, Cmid, C), dtype=jnp.float32)
    b2 = 0.05 * jax.random.normal(k4, (C,), dtype=jnp.float32)

    out, fea2 = shortcut_block_with2return((x,), w1, b1, w2, b2)
    jax.block_until_ready(out)
    jax.block_until_ready(fea2)

    ref_out, ref_fea2 = _reference(x, w1, b1, w2, b2)
    assert out.shape == (N, C, H, W) and fea2.shape == (N, Cmid, H, W)
    # bf16 MXU operands -> compare against the bf16-operand / f32-accumulation
    # reference with a correspondingly relaxed tolerance.
    assert jnp.allclose(out, ref_out, atol=2e-2, rtol=2e-2), (
        float(jnp.max(jnp.abs(out - ref_out))))
    assert jnp.allclose(fea2, ref_fea2, atol=2e-2, rtol=2e-2), (
        float(jnp.max(jnp.abs(fea2 - ref_fea2))))
    print("KERNEL_OK")
</pallas_src>

<mosaic_0001>
module attributes {stable_mosaic.version = 11 : i64} {
  func.func @_shortcut_kernel(%arg0: i32, %arg1: memref<1x4x256xf32, #tpu.memory_space<vmem>>, %arg2: memref<9x256xf32, #tpu.memory_space<vmem>>, %arg3: memref<4x36xbf16, #tpu.memory_space<vmem>>, %arg4: memref<4x1xf32, #tpu.memory_space<vmem>>, %arg5: memref<4x36xbf16, #tpu.memory_space<vmem>>, %arg6: memref<4x1xf32, #tpu.memory_space<vmem>>, %arg7: memref<1x4x256xf32, #tpu.memory_space<vmem>>, %arg8: memref<1x4x256xf32, #tpu.memory_space<vmem>>, %arg9: memref<36x256xbf16, #tpu.memory_space<vmem>>) attributes {dimension_semantics = [#tpu.dimension_semantics<parallel>], iteration_bounds = array<i64: 2>, scalar_prefetch = 0 : i64, scratch_operands = 1 : i64, tpu.core_type = #tpu.core_type<tc>, window_params = [{transform_indices = @transform_0, window_bounds = array<i64: 1, 4, 256>}, {pipeline_mode = #tpu.pipeline_mode<synchronous>, transform_indices = @transform_1, window_bounds = array<i64: 9, 256>}, {pipeline_mode = #tpu.pipeline_mode<synchronous>, transform_indices = @transform_2, window_bounds = array<i64: 4, 36>}, {pipeline_mode = #tpu.pipeline_mode<synchronous>, transform_indices = @transform_3, window_bounds = array<i64: 4, 1>}, {pipeline_mode = #tpu.pipeline_mode<synchronous>, transform_indices = @transform_4, window_bounds = array<i64: 4, 36>}, {pipeline_mode = #tpu.pipeline_mode<synchronous>, transform_indices = @transform_5, window_bounds = array<i64: 4, 1>}, {transform_indices = @transform_6, window_bounds = array<i64: 1, 4, 256>}, {transform_indices = @transform_7, window_bounds = array<i64: 1, 4, 256>}]} {
    %c0 = arith.constant 0 : index
    %c0_0 = arith.constant 0 : index
    %c0_1 = arith.constant 0 : index
    %0 = vector.load %arg1[%c0, %c0_0, %c0_1] : memref<1x4x256xf32, #tpu.memory_space<vmem>>, vector<1x4x256xf32>
    %1 = vector.shape_cast %0 : vector<1x4x256xf32> to vector<4x256xf32>
    %c17_i32 = arith.constant 17 : i32
    %2 = tpu.dynamic_rotate %1 by %c17_i32 dim 1 : vector<4x256xf32>, i32 -> vector<4x256xf32>
    %c0_2 = arith.constant 0 : index
    %c0_3 = arith.constant 0 : index
    %3 = vector.load %arg2[%c0_2, %c0_3] : memref<9x256xf32, #tpu.memory_space<vmem>>, vector<1x256xf32>
    %4 = vector.broadcast %3 : vector<1x256xf32> to vector<4x256xf32>
    %5 = arith.mulf %2, %4 : vector<4x256xf32>
    %6 = arith.truncf %5 : vector<4x256xf32> to vector<4x256xbf16>
    %c0_4 = arith.constant 0 : index
    %c0_5 = arith.constant 0 : index
    %7 = vector.load %arg9[%c0_4, %c0_5] : memref<36x256xbf16, #tpu.memory_space<vmem>>, vector<4x256xbf16>
    tpu.vector_store %arg9[%c0_4, %c0_5], %6 {strides = array<i32>} : memref<36x256xbf16, #tpu.memory_space<vmem>>, vector<4x256xbf16>,
    %c16_i32 = arith.constant 16 : i32
    %8 = tpu.dynamic_rotate %1 by %c16_i32 dim 1 : vector<4x256xf32>, i32 -> vector<4x256xf32>
    %c1 = arith.constant 1 : index
    %c0_6 = arith.constant 0 : index
    %9 = vector.load %arg2[%c1, %c0_6] : memref<9x256xf32, #tpu.memory_space<vmem>>, vector<1x256xf32>
    %10 = vector.broadcast %9 : vector<1x256xf32> to vector<4x256xf32>
    %11 = arith.mulf %8, %10 : vector<4x256xf32>
    %12 = arith.truncf %11 : vector<4x256xf32> to vector<4x256xbf16>
    %c4 = arith.constant 4 : index
    %c0_7 = arith.constant 0 : index
    %13 = vector.load %arg9[%c4, %c0_7] : memref<36x256xbf16, #tpu.memory_space<vmem>>, vector<4x256xbf16>
    tpu.vector_store %arg9[%c4, %c0_7], %12 {strides = array<i32>} : memref<36x256xbf16, #tpu.memory_space<vmem>>, vector<4x256xbf16>,
    %c15_i32 = arith.constant 15 : i32
    %14 = tpu.dynamic_rotate %1 by %c15_i32 dim 1 : vector<4x256xf32>, i32 -> vector<4x256xf32>
    %c2 = arith.constant 2 : index
    %c0_8 = arith.constant 0 : index
    %15 = vector.load %arg2[%c2, %c0_8] : memref<9x256xf32, #tpu.memory_space<vmem>>, vector<1x256xf32>
    %16 = vector.broadcast %15 : vector<1x256xf32> to vector<4x256xf32>
    %17 = arith.mulf %14, %16 : vector<4x256xf32>
    %18 = arith.truncf %17 : vector<4x256xf32> to vector<4x256xbf16>
    %c8 = arith.constant 8 : index
    %c0_9 = arith.constant 0 : index
    %19 = vector.load %arg9[%c8, %c0_9] : memref<36x256xbf16, #tpu.memory_space<vmem>>, vector<4x256xbf16>
    tpu.vector_store %arg9[%c8, %c0_9], %18 {strides = array<i32>} : memref<36x256xbf16, #tpu.memory_space<vmem>>, vector<4x256xbf16>,
    %c1_i32 = arith.constant 1 : i32
    %20 = tpu.dynamic_rotate %1 by %c1_i32 dim 1 : vector<4x256xf32>, i32 -> vector<4x256xf32>
    %c3 = arith.constant 3 : index
    %c0_10 = arith.constant 0 : index
    %21 = vector.load %arg2[%c3, %c0_10] : memref<9x256xf32, #tpu.memory_space<vmem>>, vector<1x256xf32>
    %22 = vector.broadcast %21 : vector<1x256xf32> to vector<4x256xf32>
    %23 = arith.mulf %20, %22 : vector<4x256xf32>
    %24 = arith.truncf %23 : vector<4x256xf32> to vector<4x256xbf16>
    %c12 = arith.constant 12 : index
    %c0_11 = arith.constant 0 : index
    %25 = vector.load %arg9[%c12, %c0_11] : memref<36x256xbf16, #tpu.memory_space<vmem>>, vector<4x256xbf16>
    tpu.vector_store %arg9[%c12, %c0_11], %24 {strides = array<i32>} : memref<36x256xbf16, #tpu.memory_space<vmem>>, vector<4x256xbf16>,
    %c4_12 = arith.constant 4 : index
    %c0_13 = arith.constant 0 : index
    %26 = vector.load %arg2[%c4_12, %c0_13] : memref<9x256xf32, #tpu.memory_space<vmem>>, vector<1x256xf32>
    %27 = vector.broadcast %26 : vector<1x256xf32> to vector<4x256xf32>
    %28 = arith.mulf %1, %27 : vector<4x256xf32>
    %29 = arith.truncf %28 : vector<4x256xf32> to vector<4x256xbf16>
    %c16 = arith.constant 16 : index
    %c0_14 = arith.constant 0 : index
    %30 = vector.load %arg9[%c16, %c0_14] : memref<36x256xbf16, #tpu.memory_space<vmem>>, vector<4x256xbf16>
    tpu.vector_store %arg9[%c16, %c0_14], %29 {strides = array<i32>} : memref<36x256xbf16, #tpu.memory_space<vmem>>, vector<4x256xbf16>,
    %c255_i32 = arith.constant 255 : i32
    %31 = tpu.dynamic_rotate %1 by %c255_i32 dim 1 : vector<4x256xf32>, i32 -> vector<4x256xf32>
    %c5 = arith.constant 5 : index
    %c0_15 = arith.constant 0 : index
    %32 = vector.load %arg2[%c5, %c0_15] : memref<9x256xf32, #tpu.memory_space<vmem>>, vector<1x256xf32>
    %33 = vector.broadcast %32 : vector<1x256xf32> to vector<4x256xf32>
    %34 = arith.mulf %31, %33 : vector<4x256xf32>
    %35 = arith.truncf %34 : vector<4x256xf32> to vector<4x256xbf16>
    %c20 = arith.constant 20 : index
    %c0_16 = arith.constant 0 : index
    %36 = vector.load %arg9[%c20, %c0_16] : memref<36x256xbf16, #tpu.memory_space<vmem>>, vector<4x256xbf16>
    tpu.vector_store %arg9[%c20, %c0_16], %35 {strides = array<i32>} : memref<36x256xbf16, #tpu.memory_space<vmem>>, vector<4x256xbf16>,
    %c241_i32 = arith.constant 241 : i32
    %37 = tpu.dynamic_rotate %1 by %c241_i32 dim 1 : vector<4x256xf32>, i32 -> vector<4x256xf32>
    %c6 = arith.constant 6 : index
    %c0_17 = arith.constant 0 : index
    %38 = vector.load %arg2[%c6, %c0_17] : memref<9x256xf32, #tpu.memory_space<vmem>>, vector<1x256xf32>
    %39 = vector.broadcast %38 : vector<1x256xf32> to vector<4x256xf32>
    %40 = arith.mulf %37, %39 : vector<4x256xf32>
    %41 = arith.truncf %40 : vector<4x256xf32> to vector<4x256xbf16>
    %c24 = arith.constant 24 : index
    %c0_18 = arith.constant 0 : index
    %42 = vector.load %arg9[%c24, %c0_18] : memref<36x256xbf16, #tpu.memory_space<vmem>>, vector<4x256xbf16>
    tpu.vector_store %arg9[%c24, %c0_18], %41 {strides = array<i32>} : memref<36x256xbf16, #tpu.memory_space<vmem>>, vector<4x256xbf16>,
    %c240_i32 = arith.constant 240 : i32
    %43 = tpu.dynamic_rotate %1 by %c240_i32 dim 1 : vector<4x256xf32>, i32 -> vector<4x256xf32>
    %c7 = arith.constant 7 : index
    %c0_19 = arith.constant 0 : index
    %44 = vector.load %arg2[%c7, %c0_19] : memref<9x256xf32, #tpu.memory_space<vmem>>, vector<1x256xf32>
    %45 = vector.broadcast %44 : vector<1x256xf32> to vector<4x256xf32>
    %46 = arith.mulf %43, %45 : vector<4x256xf32>
    %47 = arith.truncf %46 : vector<4x256xf32> to vector<4x256xbf16>
    %c28 = arith.constant 28 : index
    %c0_20 = arith.constant 0 : index
    %48 = vector.load %arg9[%c28, %c0_20] : memref<36x256xbf16, #tpu.memory_space<vmem>>, vector<4x256xbf16>
    tpu.vector_store %arg9[%c28, %c0_20], %47 {strides = array<i32>} : memref<36x256xbf16, #tpu.memory_space<vmem>>, vector<4x256xbf16>,
    %c239_i32 = arith.constant 239 : i32
    %49 = tpu.dynamic_rotate %1 by %c239_i32 dim 1 : vector<4x256xf32>, i32 -> vector<4x256xf32>
    %c8_21 = arith.constant 8 : index
    %c0_22 = arith.constant 0 : index
    %50 = vector.load %arg2[%c8_21, %c0_22] : memref<9x256xf32, #tpu.memory_space<vmem>>, vector<1x256xf32>
    %51 = vector.broadcast %50 : vector<1x256xf32> to vector<4x256xf32>
    %52 = arith.mulf %49, %51 : vector<4x256xf32>
    %53 = arith.truncf %52 : vector<4x256xf32> to vector<4x256xbf16>
    %c32 = arith.constant 32 : index
    %c0_23 = arith.constant 0 : index
    %54 = vector.load %arg9[%c32, %c0_23] : memref<36x256xbf16, #tpu.memory_space<vmem>>, vector<4x256xbf16>
    tpu.vector_store %arg9[%c32, %c0_23], %53 {strides = array<i32>} : memref<36x256xbf16, #tpu.memory_space<vmem>>, vector<4x256xbf16>,
    %c0_24 = arith.constant 0 : index
    %c0_25 = arith.constant 0 : index
    %55 = vector.load %arg3[%c0_24, %c0_25] : memref<4x36xbf16, #tpu.memory_space<vmem>>, vector<4x36xbf16>
    %c0_26 = arith.constant 0 : index
    %c0_27 = arith.constant 0 : index
    %56 = vector.load %arg9[%c0_26, %c0_27] : memref<36x256xbf16, #tpu.memory_space<vmem>>, vector<36x256xbf16>
    %cst = arith.constant dense<0.000000e+00> : vector<4x256xf32>
    %57 = tpu.matmul %55, %56, %cst {dimension_numbers = #tpu.dot_dimension_numbers<[1], [0], [0], [1], [0, 0, 1, 1], [], []>} : vector<4x36xbf16>, vector<36x256xbf16>, vector<4x256xf32> -> vector<4x256xf32>
    %c0_28 = arith.constant 0 : index
    %c0_29 = arith.constant 0 : index
    %58 = vector.load %arg4[%c0_28, %c0_29] : memref<4x1xf32, #tpu.memory_space<vmem>>, vector<4x1xf32>
    %59 = vector.broadcast %58 : vector<4x1xf32> to vector<4x256xf32>
    %60 = arith.addf %57, %59 : vector<4x256xf32>
    %cst_30 = arith.constant 0.000000e+00 : f32
    %61 = vector.broadcast %cst_30 : f32 to vector<4x256xf32>
    %62 = arith.maximumf %60, %61 : vector<4x256xf32>
    %c0_31 = arith.constant 0 : index
    %c0_32 = arith.constant 0 : index
    %c0_33 = arith.constant 0 : index
    %63 = vector.load %arg8[%c0_31, %c0_32, %c0_33] : memref<1x4x256xf32, #tpu.memory_space<vmem>>, vector<1x4x256xf32>
    %64 = vector.shape_cast %63 : vector<1x4x256xf32> to vector<4x256xf32>
    %65 = vector.shape_cast %62 : vector<4x256xf32> to vector<1x4x256xf32>
    tpu.vector_store %arg8[%c0_31, %c0_32, %c0_33], %65 {strides = array<i32>} : memref<1x4x256xf32, #tpu.memory_space<vmem>>, vector<1x4x256xf32>,
    %c17_i32_34 = arith.constant 17 : i32
    %66 = tpu.dynamic_rotate %62 by %c17_i32_34 dim 1 : vector<4x256xf32>, i32 -> vector<4x256xf32>
    %c0_35 = arith.constant 0 : index
    %c0_36 = arith.constant 0 : index
    %67 = vector.load %arg2[%c0_35, %c0_36] : memref<9x256xf32, #tpu.memory_space<vmem>>, vector<1x256xf32>
    %68 = vector.broadcast %67 : vector<1x256xf32> to vector<4x256xf32>
    %69 = arith.mulf %66, %68 : vector<4x256xf32>
    %70 = arith.truncf %69 : vector<4x256xf32> to vector<4x256xbf16>
    %c0_37 = arith.constant 0 : index
    %c0_38 = arith.constant 0 : index
    %71 = vector.load %arg9[%c0_37, %c0_38] : memref<36x256xbf16, #tpu.memory_space<vmem>>, vector<4x256xbf16>
    tpu.vector_store %arg9[%c0_37, %c0_38], %70 {strides = array<i32>} : memref<36x256xbf16, #tpu.memory_space<vmem>>, vector<4x256xbf16>,
    %c16_i32_39 = arith.constant 16 : i32
    %72 = tpu.dynamic_rotate %62 by %c16_i32_39 dim 1 : vector<4x256xf32>, i32 -> vector<4x256xf32>
    %c1_40 = arith.constant 1 : index
    %c0_41 = arith.constant 0 : index
    %73 = vector.load %arg2[%c1_40, %c0_41] : memref<9x256xf32, #tpu.memory_space<vmem>>, vector<1x256xf32>
    %74 = vector.broadcast %73 : vector<1x256xf32> to vector<4x256xf32>
    %75 = arith.mulf %72, %74 : vector<4x256xf32>
    %76 = arith.truncf %75 : vector<4x256xf32> to vector<4x256xbf16>
    %c4_42 = arith.constant 4 : index
    %c0_43 = arith.constant 0 : index
    %77 = vector.load %arg9[%c4_42, %c0_43] : memref<36x256xbf16, #tpu.memory_space<vmem>>, vector<4x256xbf16>
    tpu.vector_store %arg9[%c4_42, %c0_43], %76 {strides = array<i32>} : memref<36x256xbf16, #tpu.memory_space<vmem>>, vector<4x256xbf16>,
    %c15_i32_44 = arith.constant 15 : i32
    %78 = tpu.dynamic_rotate %62 by %c15_i32_44 dim 1 : vector<4x256xf32>, i32 -> vector<4x256xf32>
    %c2_45 = arith.constant 2 : index
    %c0_46 = arith.constant 0 : index
    %79 = vector.load %arg2[%c2_45, %c0_46] : memref<9x256xf32, #tpu.memory_space<vmem>>, vector<1x256xf32>
    %80 = vector.broadcast %79 : vector<1x256xf32> to vector<4x256xf32>
    %81 = arith.mulf %78, %80 : vector<4x256xf32>
    %82 = arith.truncf %81 : vector<4x256xf32> to vector<4x256xbf16>
    %c8_47 = arith.constant 8 : index
    %c0_48 = arith.constant 0 : index
    %83 = vector.load %arg9[%c8_47, %c0_48] : memref<36x256xbf16, #tpu.memory_space<vmem>>, vector<4x256xbf16>
    tpu.vector_store %arg9[%c8_47, %c0_48], %82 {strides = array<i32>} : memref<36x256xbf16, #tpu.memory_space<vmem>>, vector<4x256xbf16>,
    %c1_i32_49 = arith.constant 1 : i32
    %84 = tpu.dynamic_rotate %62 by %c1_i32_49 dim 1 : vector<4x256xf32>, i32 -> vector<4x256xf32>
    %c3_50 = arith.constant 3 : index
    %c0_51 = arith.constant 0 : index
    %85 = vector.load %arg2[%c3_50, %c0_51] : memref<9x256xf32, #tpu.memory_space<vmem>>, vector<1x256xf32>
    %86 = vector.broadcast %85 : vector<1x256xf32> to vector<4x256xf32>
    %87 = arith.mulf %84, %86 : vector<4x256xf32>
    %88 = arith.truncf %87 : vector<4x256xf32> to vector<4x256xbf16>
    %c12_52 = arith.constant 12 : index
    %c0_53 = arith.constant 0 : index
    %89 = vector.load %arg9[%c12_52, %c0_53] : memref<36x256xbf16, #tpu.memory_space<vmem>>, vector<4x256xbf16>
    tpu.vector_store %arg9[%c12_52, %c0_53], %88 {strides = array<i32>} : memref<36x256xbf16, #tpu.memory_space<vmem>>, vector<4x256xbf16>,
    %c4_54 = arith.constant 4 : index
    %c0_55 = arith.constant 0 : index
    %90 = vector.load %arg2[%c4_54, %c0_55] : memref<9x256xf32, #tpu.memory_space<vmem>>, vector<1x256xf32>
    %91 = vector.broadcast %90 : vector<1x256xf32> to vector<4x256xf32>
    %92 = arith.mulf %62, %91 : vector<4x256xf32>
    %93 = arith.truncf %92 : vector<4x256xf32> to vector<4x256xbf16>
    %c16_56 = arith.constant 16 : index
    %c0_57 = arith.constant 0 : index
    %94 = vector.load %arg9[%c16_56, %c0_57] : memref<36x256xbf16, #tpu.memory_space<vmem>>, vector<4x256xbf16>
    tpu.vector_store %arg9[%c16_56, %c0_57], %93 {strides = array<i32>} : memref<36x256xbf16, #tpu.memory_space<vmem>>, vector<4x256xbf16>,
    %c255_i32_58 = arith.constant 255 : i32
    %95 = tpu.dynamic_rotate %62 by %c255_i32_58 dim 1 : vector<4x256xf32>, i32 -> vector<4x256xf32>
    %c5_59 = arith.constant 5 : index
    %c0_60 = arith.constant 0 : index
    %96 = vector.load %arg2[%c5_59, %c0_60] : memref<9x256xf32, #tpu.memory_space<vmem>>, vector<1x256xf32>
    %97 = vector.broadcast %96 : vector<1x256xf32> to vector<4x256xf32>
    %98 = arith.mulf %95, %97 : vector<4x256xf32>
    %99 = arith.truncf %98 : vector<4x256xf32> to vector<4x256xbf16>
    %c20_61 = arith.constant 20 : index
    %c0_62 = arith.constant 0 : index
    %100 = vector.load %arg9[%c20_61, %c0_62] : memref<36x256xbf16, #tpu.memory_space<vmem>>, vector<4x256xbf16>
    tpu.vector_store %arg9[%c20_61, %c0_62], %99 {strides = array<i32>} : memref<36x256xbf16, #tpu.memory_space<vmem>>, vector<4x256xbf16>,
    %c241_i32_63 = arith.constant 241 : i32
    %101 = tpu.dynamic_rotate %62 by %c241_i32_63 dim 1 : vector<4x256xf32>, i32 -> vector<4x256xf32>
    %c6_64 = arith.constant 6 : index
    %c0_65 = arith.constant 0 : index
    %102 = vector.load %arg2[%c6_64, %c0_65] : memref<9x256xf32, #tpu.memory_space<vmem>>, vector<1x256xf32>
    %103 = vector.broadcast %102 : vector<1x256xf32> to vector<4x256xf32>
    %104 = arith.mulf %101, %103 : vector<4x256xf32>
    %105 = arith.truncf %104 : vector<4x256xf32> to vector<4x256xbf16>
    %c24_66 = arith.constant 24 : index
    %c0_67 = arith.constant 0 : index
    %106 = vector.load %arg9[%c24_66, %c0_67] : memref<36x256xbf16, #tpu.memory_space<vmem>>, vector<4x256xbf16>
    tpu.vector_store %arg9[%c24_66, %c0_67], %105 {strides = array<i32>} : memref<36x256xbf16, #tpu.memory_space<vmem>>, vector<4x256xbf16>,
    %c240_i32_68 = arith.constant 240 : i32
    %107 = tpu.dynamic_rotate %62 by %c240_i32_68 dim 1 : vector<4x256xf32>, i32 -> vector<4x256xf32>
    %c7_69 = arith.constant 7 : index
    %c0_70 = arith.constant 0 : index
    %108 = vector.load %arg2[%c7_69, %c0_70] : memref<9x256xf32, #tpu.memory_space<vmem>>, vector<1x256xf32>
    %109 = vector.broadcast %108 : vector<1x256xf32> to vector<4x256xf32>
    %110 = arith.mulf %107, %109 : vector<4x256xf32>
    %111 = arith.truncf %110 : vector<4x256xf32> to vector<4x256xbf16>
    %c28_71 = arith.constant 28 : index
    %c0_72 = arith.constant 0 : index
    %112 = vector.load %arg9[%c28_71, %c0_72] : memref<36x256xbf16, #tpu.memory_space<vmem>>, vector<4x256xbf16>
    tpu.vector_store %arg9[%c28_71, %c0_72], %111 {strides = array<i32>} : memref<36x256xbf16, #tpu.memory_space<vmem>>, vector<4x256xbf16>,
    %c239_i32_73 = arith.constant 239 : i32
    %113 = tpu.dynamic_rotate %62 by %c239_i32_73 dim 1 : vector<4x256xf32>, i32 -> vector<4x256xf32>
    %c8_74 = arith.constant 8 : index
    %c0_75 = arith.constant 0 : index
    %114 = vector.load %arg2[%c8_74, %c0_75] : memref<9x256xf32, #tpu.memory_space<vmem>>, vector<1x256xf32>
    %115 = vector.broadcast %114 : vector<1x256xf32> to vector<4x256xf32>
    %116 = arith.mulf %113, %115 : vector<4x256xf32>
    %117 = arith.truncf %116 : vector<4x256xf32> to vector<4x256xbf16>
    %c32_76 = arith.constant 32 : index
    %c0_77 = arith.constant 0 : index
    %118 = vector.load %arg9[%c32_76, %c0_77] : memref<36x256xbf16, #tpu.memory_space<vmem>>, vector<4x256xbf16>
    tpu.vector_store %arg9[%c32_76, %c0_77], %117 {strides = array<i32>} : memref<36x256xbf16, #tpu.memory_space<vmem>>, vector<4x256xbf16>,
    %c0_78 = arith.constant 0 : index
    %c0_79 = arith.constant 0 : index
    %119 = vector.load %arg5[%c0_78, %c0_79] : memref<4x36xbf16, #tpu.memory_space<vmem>>, vector<4x36xbf16>
    %c0_80 = arith.constant 0 : index
    %c0_81 = arith.constant 0 : index
    %120 = vector.load %arg9[%c0_80, %c0_81] : memref<36x256xbf16, #tpu.memory_space<vmem>>, vector<36x256xbf16>
    %cst_82 = arith.constant dense<0.000000e+00> : vector<4x256xf32>
    %121 = tpu.matmul %119, %120, %cst_82 {dimension_numbers = #tpu.dot_dimension_numbers<[1], [0], [0], [1], [0, 0, 1, 1], [], []>} : vector<4x36xbf16>, vector<36x256xbf16>, vector<4x256xf32> -> vector<4x256xf32>
    %c0_83 = arith.constant 0 : index
    %c0_84 = arith.constant 0 : index
    %122 = vector.load %arg6[%c0_83, %c0_84] : memref<4x1xf32, #tpu.memory_space<vmem>>, vector<4x1xf32>
    %123 = vector.broadcast %122 : vector<4x1xf32> to vector<4x256xf32>
    %124 = arith.addf %121, %123 : vector<4x256xf32>
    %c0_85 = arith.constant 0 : index
    %c0_86 = arith.constant 0 : index
    %c0_87 = arith.constant 0 : index
    %125 = vector.load %arg1[%c0_85, %c0_86, %c0_87] : memref<1x4x256xf32, #tpu.memory_space<vmem>>, vector<1x4x256xf32>
    %126 = vector.shape_cast %125 : vector<1x4x256xf32> to vector<4x256xf32>
    %127 = arith.addf %126, %124 : vector<4x256xf32>
    %c0_88 = arith.constant 0 : index
    %c0_89 = arith.constant 0 : index
    %c0_90 = arith.constant 0 : index
    %128 = vector.load %arg7[%c0_88, %c0_89, %c0_90] : memref<1x4x256xf32, #tpu.memory_space<vmem>>, vector<1x4x256xf32>
    %129 = vector.shape_cast %128 : vector<1x4x256xf32> to vector<4x256xf32>
    %130 = vector.shape_cast %127 : vector<4x256xf32> to vector<1x4x256xf32>
    tpu.vector_store %arg7[%c0_88, %c0_89, %c0_90], %130 {strides = array<i32>} : memref<1x4x256xf32, #tpu.memory_space<vmem>>, vector<1x4x256xf32>,
    return
  }
  func.func @transform_0(%arg0: i32) -> (i32, i32, i32) {
    %c0_i32 = arith.constant 0 : i32
    %c0_i32_0 = arith.constant 0 : i32
    %c0_i32_1 = arith.constant 0 : i32
    return %arg0, %c0_i32, %c0_i32_0 : i32, i32, i32
  }
  func.func @transform_1(%arg0: i32) -> (i32, i32) {
    %c0_i32 = arith.constant 0 : i32
    %c0_i32_0 = arith.constant 0 : i32
    %c0_i32_1 = arith.constant 0 : i32
    return %c0_i32, %c0_i32_0 : i32, i32
  }
  func.func @transform_2(%arg0: i32) -> (i32, i32) {
    %c0_i32 = arith.constant 0 : i32
    %c0_i32_0 = arith.constant 0 : i32
    %c0_i32_1 = arith.constant 0 : i32
    return %c0_i32, %c0_i32_0 : i32, i32
  }
  func.func @transform_3(%arg0: i32) -> (i32, i32) {
    %c0_i32 = arith.constant 0 : i32
    %c0_i32_0 = arith.constant 0 : i32
    %c0_i32_1 = arith.constant 0 : i32
    return %c0_i32, %c0_i32_0 : i32, i32
  }
  func.func @transform_4(%arg0: i32) -> (i32, i32) {
    %c0_i32 = arith.constant 0 : i32
    %c0_i32_0 = arith.constant 0 : i32
    %c0_i32_1 = arith.constant 0 : i32
    return %c0_i32, %c0_i32_0 : i32, i32
  }
  func.func @transform_5(%arg0: i32) -> (i32, i32) {
    %c0_i32 = arith.constant 0 : i32
    %c0_i32_0 = arith.constant 0 : i32
    %c0_i32_1 = arith.constant 0 : i32
    return %c0_i32, %c0_i32_0 : i32, i32
  }
  func.func @transform_6(%arg0: i32) -> (i32, i32, i32) {
    %c0_i32 = arith.constant 0 : i32
    %c0_i32_0 = arith.constant 0 : i32
    %c0_i32_1 = arith.constant 0 : i32
    return %arg0, %c0_i32, %c0_i32_0 : i32, i32, i32
  }
  func.func @transform_7(%arg0: i32) -> (i32, i32, i32) {
    %c0_i32 = arith.constant 0 : i32
    %c0_i32_0 = arith.constant 0 : i32
    %c0_i32_1 = arith.constant 0 : i32
    return %arg0, %c0_i32, %c0_i32_0 : i32, i32, i32
  }
}

</mosaic_0001>

<llo_original>
// kernel: tpu_custom_call.1
$region0: #{tpu_custom_call.1}
  #allocation0 [shape = 'u32[]', space=smem, size = 0x4, offset = 0x4, fixed_abs, tag = 'smem constant byte address 0x4 - core index']
  #allocation1 [shape = 'u32[72,128]{1,0:T(1,128)}', space=vmem, size = 0x9000, scoped, tag = 'internal scratch']
  #allocation2 [shape = 'bf16[36,256]{1,0:T(8,128)(2,1)}', space=vmem, size = 0x5000, scoped, tag = 'scratch operand']
  %s0 = inlined_call_operand.hbm [shape: f32[2,4,256], index: 0, kind: input, shape index: {}]
  %s1 = inlined_call_operand.hbm [shape: f32[9,256], index: 1, kind: input, shape index: {}]
  %s2 = inlined_call_operand.vmem [shape: bf16[4,36], index: 2, kind: input, shape index: {}]
  %s3 = inlined_call_operand.vmem [shape: f32[4,1], index: 3, kind: input, shape index: {}]
  %s4 = inlined_call_operand.vmem [shape: bf16[4,36], index: 4, kind: input, shape index: {}]
  %s5 = inlined_call_operand.vmem [shape: f32[4,1], index: 5, kind: input, shape index: {}]
  %s6 = inlined_call_operand.hbm [shape: f32[2,4,256], index: 6, kind: output, shape index: {0}]
  %s7 = inlined_call_operand.hbm [shape: f32[2,4,256], index: 7, kind: output, shape index: {1}]
  %8 = xla_tuple %s6, %s7
  %s9 = sld [smem:[#allocation0]]
  $region73: #{tpu_custom_call.1} parent=0
    _
  %s11 = ssub.s32 1, %s9
  %s12 = scalar_select 0, %s11, %s9
  $region1: #{tpu_custom_call.1} parent=0
    #allocation3 [shape = 'u8[8192]{0}', space=vmem, size = 0x2000, scoped, tag = 'input window, operand 0']
    #allocation4 [shape = 's32[2]{0}', space=sflag, size = 0x8, scoped, tag = 'scoped memory for tpu_custom_call.1']
    #allocation5 [shape = 's32[2]{0}', space=sflag, size = 0x8, scoped, tag = 'scoped memory for tpu_custom_call.1']
    #allocation6 [shape = 'u8[16384]{0}', space=vmem, size = 0x4000, scoped, tag = 'input window, operand 1, single buffered']
    #allocation7 [shape = 's32[1]{0}', space=sflag, size = 0x4, scoped, tag = 'scoped memory for tpu_custom_call.1']
    #allocation8 [shape = 'u8[8192]{0}', space=vmem, size = 0x2000, scoped, tag = 'output window, operand 0']
    #allocation9 [shape = 'u8[8192]{0}', space=vmem, size = 0x2000, scoped, tag = 'output window, operand 1']
    #allocation10 [shape = 's32[2]{0}', space=sflag, size = 0x8, scoped, tag = 'scoped memory for tpu_custom_call.1']
    %13 = vsyncpa [#allocation4], 0
    %s14 = scalar_lea.sflag [#allocation4], 1
    %15 = vsyncpa %s14, 0
    %16 = vsyncpa [#allocation7], 0
    %17 = vsyncpa [#allocation5], 0
    %s18 = scalar_lea.sflag [#allocation5], 1
    %19 = vsyncpa %s18, 0
    %20 = vsyncpa [#allocation10], 0
    %s21 = scalar_lea.sflag [#allocation10], 1
    %22 = vsyncpa %s21, 0
    loop: start=0, step=1, limit=4
    $region2: #{tpu_custom_call.1} parent=1 // loop_pre_header
      _
    $region3: #{tpu_custom_call.1} parent=1 // loop_header
      %s24 = sphi 0, %s28
      %p25 = scmp.ge.s32.totalorder %s24, 4
      %s34 = sphi 0, %s36
      %s37 = sphi 0, %s34
      %s38 = sphi 0, %s37
      %s54 = sphi 0, %s38
      %s58 = sphi 0, %s58
      %s60 = sphi 0, %s58
      %s61 = sphi 0, %s60
      %s75 = sphi 0, %s61
      %s79 = sphi 0, %s79
      %s81 = sphi 0, %s79
      %s82 = sphi 0, %s81
      %s96 = sphi 0, %s82
      %s100 = sphi 0, %s100
      %s102 = sphi 0, %s100
      %s103 = sphi 0, %s102
      %s117 = sphi 0, %s103
      %s121 = sphi 0, %s121
      %s123 = sphi 0, %s121
      %s124 = sphi 0, %s123
      %s138 = sphi 0, %s124
      %s142 = sphi 0, %s142
      %s144 = sphi 0, %s142
      %s145 = sphi 0, %s144
      %s159 = sphi 0, %s145
      %s165 = sphi 0, %s167
      %s168 = sphi 0, %s165
      %s169 = sphi 0, %s168
      %s185 = sphi 0, %s169
      %s191 = sphi 0, %s193
      %s194 = sphi 0, %s191
      %s195 = sphi 0, %s194
      %s211 = sphi 0, %s195
    $region4: #{tpu_custom_call.1} parent=1 // loop_header_branch
      %27 = sbr.rel (%p25) target = $region8
    $region5: #{tpu_custom_call.1} parent=1 // loop_body
      %s29 = ssub.s32 %s24, 1
      %s30 = ssub.s32 %s24, 2
      %s31 = sadd.s32 %s24, 1
      %s32 = ssub.s32 %s24, %s31
      %p33 = scmp.eq.s32.totalorder %s32, 0
      %s35 = sadd.s32 %s34, 1
      %s36 = scalar_select %p33, %s34, %s35
      %p39 = pneg %p33
      %p40 = scmp.eq.s32.totalorder %s24, 1
      %p41 = por %p39, %p40
      %p42 = scmp.ne.s32.totalorder %s34, %s37
      %p43 = scmp.eq.s32.totalorder %s24, 0
      %p44 = por %p42, %p43
      %p45 = scmp.ne.s32.totalorder %s34, %s37
      %p46 = scmp.eq.s32.totalorder %s29, 1
      %p47 = por %p45, %p46
      %p48 = scmp.ne.s32.totalorder %s37, %s38
      %p49 = scmp.eq.s32.totalorder %s29, 0
      %p50 = por %p48, %p49
      %p51 = scmp.ne.s32.totalorder %s37, %s38
      %p52 = scmp.eq.s32.totalorder %s30, 1
      %p53 = por %p51, %p52
      %p55 = scmp.ne.s32.totalorder %s38, %s54
      %p56 = scmp.eq.s32.totalorder %s30, 0
      %p57 = por %p55, %p56
      %s59 = sadd.s32 %s58, 1
      %p62 = scmp.eq.s32.totalorder %s24, 1
      %p63 = scmp.ne.s32.totalorder %s58, %s60
      %p64 = scmp.eq.s32.totalorder %s24, 0
      %p65 = por %p63, %p64
      %p66 = scmp.ne.s32.totalorder %s58, %s60
      %p67 = scmp.eq.s32.totalorder %s29, 1
      %p68 = por %p66, %p67
      %p69 = scmp.ne.s32.totalorder %s60, %s61
      %p70 = scmp.eq.s32.totalorder %s29, 0
      %p71 = por %p69, %p70
      %p72 = scmp.ne.s32.totalorder %s60, %s61
      %p73 = scmp.eq.s32.totalorder %s30, 1
      %p74 = por %p72, %p73
      %p76 = scmp.ne.s32.totalorder %s61, %s75
      %p77 = scmp.eq.s32.totalorder %s30, 0
      %p78 = por %p76, %p77
      %s80 = sadd.s32 %s79, 1
      %p83 = scmp.eq.s32.totalorder %s24, 1
      %p84 = scmp.ne.s32.totalorder %s79, %s81
      %p85 = scmp.eq.s32.totalorder %s24, 0
      %p86 = por %p84, %p85
      %p87 = scmp.ne.s32.totalorder %s79, %s81
      %p88 = scmp.eq.s32.totalorder %s29, 1
      %p89 = por %p87, %p88
      %p90 = scmp.ne.s32.totalorder %s81, %s82
      %p91 = scmp.eq.s32.totalorder %s29, 0
      %p92 = por %p90, %p91
      %p93 = scmp.ne.s32.totalorder %s81, %s82
      %p94 = scmp.eq.s32.totalorder %s30, 1
      %p95 = por %p93, %p94
      %p97 = scmp.ne.s32.totalorder %s82, %s96
      %p98 = scmp.eq.s32.totalorder %s30, 0
      %p99 = por %p97, %p98
      %s101 = sadd.s32 %s100, 1
      %p104 = scmp.eq.s32.totalorder %s24, 1
      %p105 = scmp.ne.s32.totalorder %s100, %s102
      %p106 = scmp.eq.s32.totalorder %s24, 0
      %p107 = por %p105, %p106
      %p108 = scmp.ne.s32.totalorder %s100, %s102
      %p109 = scmp.eq.s32.totalorder %s29, 1
      %p110 = por %p108, %p109
      %p111 = scmp.ne.s32.totalorder %s102, %s103
      %p112 = scmp.eq.s32.totalorder %s29, 0
      %p113 = por %p111, %p112
      %p114 = scmp.ne.s32.totalorder %s102, %s103
      %p115 = scmp.eq.s32.totalorder %s30, 1
      %p116 = por %p114, %p115
      %p118 = scmp.ne.s32.totalorder %s103, %s117
      %p119 = scmp.eq.s32.totalorder %s30, 0
      %p120 = por %p118, %p119
      %s122 = sadd.s32 %s121, 1
      %p125 = scmp.eq.s32.totalorder %s24, 1
      %p126 = scmp.ne.s32.totalorder %s121, %s123
      %p127 = scmp.eq.s32.totalorder %s24, 0
      %p128 = por %p126, %p127
      %p129 = scmp.ne.s32.totalorder %s121, %s123
      %p130 = scmp.eq.s32.totalorder %s29, 1
      %p131 = por %p129, %p130
      %p132 = scmp.ne.s32.totalorder %s123, %s124
      %p133 = scmp.eq.s32.totalorder %s29, 0
      %p134 = por %p132, %p133
      %p135 = scmp.ne.s32.totalorder %s123, %s124
      %p136 = scmp.eq.s32.totalorder %s30, 1
      %p137 = por %p135, %p136
      %p139 = scmp.ne.s32.totalorder %s124, %s138
      %p140 = scmp.eq.s32.totalorder %s30, 0
      %p141 = por %p139, %p140
      %s143 = sadd.s32 %s142, 1
      %p146 = scmp.eq.s32.totalorder %s24, 1
      %p147 = scmp.ne.s32.totalorder %s142, %s144
      %p148 = scmp.eq.s32.totalorder %s24, 0
      %p149 = por %p147, %p148
      %p150 = scmp.ne.s32.totalorder %s142, %s144
      %p151 = scmp.eq.s32.totalorder %s29, 1
      %p152 = por %p150, %p151
      %p153 = scmp.ne.s32.totalorder %s144, %s145
      %p154 = scmp.eq.s32.totalorder %s29, 0
      %p155 = por %p153, %p154
      %p156 = scmp.ne.s32.totalorder %s144, %s145
      %p157 = scmp.eq.s32.totalorder %s30, 1
      %p158 = por %p156, %p157
      %p160 = scmp.ne.s32.totalorder %s145, %s159
      %p161 = scmp.eq.s32.totalorder %s30, 0
      %p162 = por %p160, %p161
      %s163 = ssub.s32 %s24, %s31
      %p164 = scmp.eq.s32.totalorder %s163, 0
      %s166 = sadd.s32 %s165, 1
      %s167 = scalar_select %p164, %s165, %s166
      %p170 = pneg %p164
      %p171 = scmp.eq.s32.totalorder %s24, 1
      %p172 = por %p170, %p171
      %p173 = scmp.ne.s32.totalorder %s165, %s168
      %p174 = scmp.eq.s32.totalorder %s24, 0
      %p175 = por %p173, %p174
      %p176 = scmp.ne.s32.totalorder %s165, %s168
      %p177 = scmp.eq.s32.totalorder %s29, 1
      %p178 = por %p176, %p177
      %p179 = scmp.ne.s32.totalorder %s168, %s169
      %p180 = scmp.eq.s32.totalorder %s29, 0
      %p181 = por %p179, %p180
      %p182 = scmp.ne.s32.totalorder %s168, %s169
      %p183 = scmp.eq.s32.totalorder %s30, 1
      %p184 = por %p182, %p183
      %p186 = scmp.ne.s32.totalorder %s169, %s185
      %p187 = scmp.eq.s32.totalorder %s30, 0
      %p188 = por %p186, %p187
      %s189 = ssub.s32 %s24, %s31
      %p190 = scmp.eq.s32.totalorder %s189, 0
      %s192 = sadd.s32 %s191, 1
      %s193 = scalar_select %p190, %s191, %s192
      %p196 = pneg %p190
      %p197 = scmp.eq.s32.totalorder %s24, 1
      %p198 = por %p196, %p197
      %p199 = scmp.ne.s32.totalorder %s191, %s194
      %p200 = scmp.eq.s32.totalorder %s24, 0
      %p201 = por %p199, %p200
      %p202 = scmp.ne.s32.totalorder %s191, %s194
      %p203 = scmp.eq.s32.totalorder %s29, 1
      %p204 = por %p202, %p203
      %p205 = scmp.ne.s32.totalorder %s194, %s195
      %p206 = scmp.eq.s32.totalorder %s29, 0
      %p207 = por %p205, %p206
      %p208 = scmp.ne.s32.totalorder %s194, %s195
      %p209 = scmp.eq.s32.totalorder %s30, 1
      %p210 = por %p208, %p209
      %p212 = scmp.ne.s32.totalorder %s195, %s211
      %p213 = scmp.eq.s32.totalorder %s30, 0
      %p214 = por %p212, %p213
      %p215 = scmp.le.s32.totalorder 1, %s24
      %p216 = scmp.lt.s32.totalorder %s24, 3
      %p217 = pnand %p215, %p216
      %p218 = pneg %p217
      // Predicated region
      $region9: #{tpu_custom_call.1} parent=5 // pred_check
        _
      $region10: #{tpu_custom_call.1} parent=5 // pred_check_branch
        %220 = sbr.rel (%p217) target = $region12
      $region11: #{tpu_custom_call.1} parent=5 // pred_region
        %s221 = ssub.s32 %s24, 1
        // Predicated region
        $region13: #{tpu_custom_call.1} parent=11 // pred_check
          %p222 = pneg %p71
        $region14: #{tpu_custom_call.1} parent=11 // pred_check_branch
          %224 = sbr.rel (%p222) target = $region16
        $region15: #{tpu_custom_call.1} parent=11 // pred_region
          %226 = vsyncadd [#allocation7], 0
          %s227 = sshll.u32 %s1, 4
          %s228 = int_to_ptr.hbm [resolvable:$true] %s227
          %s229 = sshll.u32 [#allocation6], 4
          %s230 = int_to_ptr.vmem [resolvable:$true] %s229
          %235 = dma.hbm_to_vmem [thread:$0]  %s228, 512, %s230, [#allocation7], 256, 256, 16
        $region16: #{tpu_custom_call.1} parent=11 // pred_fallthru
          _
        // Predicated region
        $region17: #{tpu_custom_call.1} parent=11 // pred_check
          %p236 = pneg %p92
        $region18: #{tpu_custom_call.1} parent=11 // pred_check_branch
          %238 = sbr.rel (%p236) target = $region20
        $region19: #{tpu_custom_call.1} parent=11 // pred_region
          _
        $region20: #{tpu_custom_call.1} parent=11 // pred_fallthru
          _
        // Predicated region
        $region21: #{tpu_custom_call.1} parent=11 // pred_check
          %p239 = pneg %p113
        $region22: #{tpu_custom_call.1} parent=11 // pred_check_branch
          %241 = sbr.rel (%p239) target = $region24
        $region23: #{tpu_custom_call.1} parent=11 // pred_region
          _
        $region24: #{tpu_custom_call.1} parent=11 // pred_fallthru
          _
        // Predicated region
        $region25: #{tpu_custom_call.1} parent=11 // pred_check
          %p242 = pneg %p134
        $region26: #{tpu_custom_call.1} parent=11 // pred_check_branch
          %244 = sbr.rel (%p242) target = $region28
        $region27: #{tpu_custom_call.1} parent=11 // pred_region
          _
        $region28: #{tpu_custom_call.1} parent=11 // pred_fallthru
          _
        // Predicated region
        $region29: #{tpu_custom_call.1} parent=11 // pred_check
          %p245 = pneg %p155
        $region30: #{tpu_custom_call.1} parent=11 // pred_check_branch
          %247 = sbr.rel (%p245) target = $region32
        $region31: #{tpu_custom_call.1} parent=11 // pred_region
          _
        $region32: #{tpu_custom_call.1} parent=11 // pred_fallthru
          _
      $region12: #{tpu_custom_call.1} parent=5 // pred_fallthru
        _
      %p248 = scmp.lt.s32.totalorder %s24, 2
      // Predicated region
      $region33: #{tpu_custom_call.1} parent=5 // pred_check
        %p249 = pneg %p248
      $region34: #{tpu_custom_call.1} parent=5 // pred_check_branch
        %251 = sbr.rel (%p249) target = $region36
      $region35: #{tpu_custom_call.1} parent=5 // pred_region
        // Predicated region
        $region37: #{tpu_custom_call.1} parent=35 // pred_check
          %p252 = pneg %p44
        $region38: #{tpu_custom_call.1} parent=35 // pred_check_branch
          %254 = sbr.rel (%p252) target = $region40
        $region39: #{tpu_custom_call.1} parent=35 // pred_region
          %s255 = sand.u32 %s34, 1
          %s256 = scalar_lea.sflag [#allocation4], %s255
          %s257 = sand.u32 %s34, 1
          %s258 = smul.addr %s257, 8
          %s259 = scalar_lea.vmem [#allocation3], %s258
          %261 = vsyncadd %s256, 0
          %s262 = smul.addr %s24, 2
          %s263 = smul.addr %s262, 4
          %s264 = scalar_lea.hbm %s0, %s263
          %s266 = sshll.u32 %s264, 4
          %s267 = int_to_ptr.hbm [resolvable:$true] %s266
          %s268 = sshll.u32 %s259, 4
          %s269 = int_to_ptr.vmem [resolvable:$true] %s268
          %271 = dma.hbm_to_vmem [thread:$0]  %s267, 128, %s269, %s256
        $region40: #{tpu_custom_call.1} parent=35 // pred_fallthru
          _
      $region36: #{tpu_custom_call.1} parent=5 // pred_fallthru
        _
      %p272 = scmp.le.s32.totalorder 1, %s24
      %p273 = scmp.lt.s32.totalorder %s24, 3
      %p274 = pnand %p272, %p273
      %p275 = pneg %p274
      // Predicated region
      $region41: #{tpu_custom_call.1} parent=5 // pred_check
        _
      $region42: #{tpu_custom_call.1} parent=5 // pred_check_branch
        %277 = sbr.rel (%p274) target = $region44
      $region43: #{tpu_custom_call.1} parent=5 // pred_region
        %s278 = ssub.s32 %s24, 1
        %s279 = sand.u32 %s37, 1
        %s280 = scalar_lea.sflag [#allocation4], %s279
        %s281 = sand.u32 %s37, 1
        %s282 = smul.addr %s281, 8
        %s283 = scalar_lea.vmem [#allocation3], %s282
        // Predicated region
        $region45: #{tpu_custom_call.1} parent=43 // pred_check
          %p284 = pneg %p50
        $region46: #{tpu_custom_call.1} parent=43 // pred_check_branch
          %286 = sbr.rel (%p284) target = $region48
        $region47: #{tpu_custom_call.1} parent=43 // pred_region
          %288 = dma.done %s280, 128
        $region48: #{tpu_custom_call.1} parent=43 // pred_fallthru
          _
        // Predicated region
        $region49: #{tpu_custom_call.1} parent=43 // pred_check
          %p289 = pneg %p71
        $region50: #{tpu_custom_call.1} parent=43 // pred_check_branch
          %291 = sbr.rel (%p289) target = $region52
        $region51: #{tpu_custom_call.1} parent=43 // pred_region
          %293 = dma.done [#allocation7], 512
        $region52: #{tpu_custom_call.1} parent=43 // pred_fallthru
          _
        %s294 = sand.u32 %s37, 1
        %s295 = scalar_lea.sflag [#allocation4], %s294
        %s296 = sand.u32 %s37, 1
        %s297 = smul.addr %s296, 8
        %s298 = scalar_lea.vmem [#allocation3], %s297
        %p299 = pneg %p50
        %p300 = pneg %p47
        %p301 = pneg %p71
        %p302 = pneg %p68
        %p303 = pneg %p92
        %p304 = pneg %p89
        %p305 = pneg %p113
        %p306 = pneg %p110
        %p307 = pneg %p134
        %p308 = pneg %p131
        %p309 = pneg %p155
        %p310 = pneg %p152
        %p311 = pneg %p181
        %p312 = pneg %p178
        %s313 = sand.u32 %s168, 1
        %s314 = scalar_lea.sflag [#allocation5], %s313
        %s315 = sand.u32 %s168, 1
        %s316 = smul.addr %s315, 8
        %s317 = scalar_lea.vmem [#allocation8], %s316
        %p318 = pneg %p207
        %p319 = pneg %p204
        %s320 = sand.u32 %s194, 1
        %s321 = scalar_lea.sflag [#allocation10], %s320
        %s322 = sand.u32 %s194, 1
        %s323 = smul.addr %s322, 8
        %s324 = scalar_lea.vmem [#allocation9], %s323
        %v326 = vld [vmem:[%s283] sm:$0xff]
        %328 = vst [vmem:[#allocation1] ss:$2 sm:$0xff] %v326
        %v329 = vld.sshfl [vmem:[#allocation1] sm:$0xff pattern:$0x75316420]
        %v330 = vld.sshfl [vmem:[#allocation1 + $0x8] sm:$0xff pattern:$0x75316420]
        %333 = vrot.lane.b32.xlu0 %v329, 17
        %v334 = vpop.permute.xlu0 %333
        %335 = vrot.lane.b32.xlu0 %v330, 17
        %v336 = vpop.permute.xlu0 %335
        %v337 = vlaneseq
        %v338 = vand.u32 %v337, 127
        %vm339 = vcmp.lt.s32.totalorder %v338, 17
        %v340 = vsel %vm339, %v334, %v336
        %v341 = vsel %vm339, %v336, %v334
        %v342 = vld [vmem:[#allocation6] ss:$8 sm:$0x3]
        %v344 = vperm.slane %v342, 0
        %v345 = vperm.slane %v342, 1
        %v348 = vmul.f32 %v341, %v344
        %v349 = vmul.f32 %v340, %v345
        %v350 = vpack.c.bf16 %v349, %v348
        %351 = vst [vmem:[#allocation2] sm:$0x33] %v350
        %352 = vst [vmem:[#allocation1] ss:$2 sm:$0xff] %v326
        %v353 = vld.sshfl [vmem:[#allocation1] sm:$0xff pattern:$0x75316420]
        %v354 = vld.sshfl [vmem:[#allocation1 + $0x8] sm:$0xff pattern:$0x75316420]
        %357 = vrot.lane.b32.xlu0 %v353, 16
        %v358 = vpop.permute.xlu0 %357
        %359 = vrot.lane.b32.xlu0 %v354, 16
        %v360 = vpop.permute.xlu0 %359
        %vm361 = vcmp.lt.s32.totalorder %v338, 16
        %v362 = vsel %vm361, %v358, %v360
        %v363 = vsel %vm361, %v360, %v358
        %s364 = scalar_lea.vmem [#allocation6], 1
        %v365 = vld [vmem:[%s364] ss:$8 sm:$0x3]
        %v367 = vperm.slane %v365, 0
        %v368 = vperm.slane %v365, 1
        %v371 = vmul.f32 %v363, %v367
        %v372 = vmul.f32 %v362, %v368
        %v373 = vpack.c.bf16 %v372, %v371
        %v375 = vrot.slane %v373, 6
        %377 = vst [vmem:[#allocation2] sm:$0xcc] %v375
        %378 = vst [vmem:[#allocation1] ss:$2 sm:$0xff] %v326
        %v379 = vld.sshfl [vmem:[#allocation1] sm:$0xff pattern:$0x75316420]
        %v380 = vld.sshfl [vmem:[#allocation1 + $0x8] sm:$0xff pattern:$0x75316420]
        %383 = vrot.lane.b32.xlu0 %v379, 15
        %v384 = vpop.permute.xlu0 %383
        %385 = vrot.lane.b32.xlu0 %v380, 15
        %v386 = vpop.permute.xlu0 %385
        %vm387 = vcmp.lt.s32.totalorder %v338, 15
        %v388 = vsel %vm387, %v384, %v386
        %v389 = vsel %vm387, %v386, %v384
        %s390 = scalar_lea.vmem [#allocation6], 2
        %v391 = vld [vmem:[%s390] ss:$8 sm:$0x3]
        %v393 = vperm.slane %v391, 0
        %v394 = vperm.slane %v391, 1
        %v397 = vmul.f32 %v389, %v393
        %v398 = vmul.f32 %v388, %v394
        %v399 = vpack.c.bf16 %v398, %v397
        %400 = vst [vmem:[#allocation2 + $0x8] sm:$0x33] %v399
        %401 = vst [vmem:[#allocation1] ss:$2 sm:$0xff] %v326
        %v402 = vld.sshfl [vmem:[#allocation1] sm:$0xff pattern:$0x75316420]
        %v403 = vld.sshfl [vmem:[#allocation1 + $0x8] sm:$0xff pattern:$0x75316420]
        %406 = vrot.lane.b32.xlu0 %v402, 1
        %v407 = vpop.permute.xlu0 %406
        %408 = vrot.lane.b32.xlu0 %v403, 1
        %v409 = vpop.permute.xlu0 %408
        %vm410 = vcmp.lt.s32.totalorder %v338, 1
        %v411 = vsel %vm410, %v407, %v409
        %v412 = vsel %vm410, %v409, %v407
        %s413 = scalar_lea.vmem [#allocation6], 3
        %v414 = vld [vmem:[%s413] ss:$8 sm:$0x3]
        %v416 = vperm.slane %v414, 0
        %v417 = vperm.slane %v414, 1
        %v420 = vmul.f32 %v412, %v416
        %v421 = vmul.f32 %v411, %v417
        %v422 = vpack.c.bf16 %v421, %v420
        %v424 = vrot.slane %v422, 6
        %426 = vst [vmem:[#allocation2 + $0x8] sm:$0xcc] %v424
        %s427 = scalar_lea.vmem [#allocation6], 4
        %v428 = vld [vmem:[%s427] ss:$8 sm:$0x3]
        %v430 = vperm.slane %v428, 0
        %v431 = vperm.slane %v428, 1
        %v432 = vrot.slane %v431, 4
        %vm433 = vcmask 1043456
        %v434 = vsel %vm433, %v430, %v432
        %v436 = vmul.f32 %v326, %v434
        %438 = vst [vmem:[#allocation1] ss:$2 sm:$0xff] %v436
        %v439 = vld.sshfl [vmem:[#allocation1] sm:$0xff pattern:$0x75316420]
        %v440 = vld.sshfl [vmem:[#allocation1 + $0x8] sm:$0xff pattern:$0x75316420]
        %v443 = vpack.c.bf16 %v440, %v439
        %444 = vst [vmem:[#allocation2 + $0x10] sm:$0x33] %v443
        %445 = vst [vmem:[#allocation1] ss:$2 sm:$0xff] %v326
        %v446 = vld.sshfl [vmem:[#allocation1] sm:$0xff pattern:$0x75316420]
        %v447 = vld.sshfl [vmem:[#allocation1 + $0x8] sm:$0xff pattern:$0x75316420]
        %450 = vrot.lane.b32.xlu0 %v446, 127
        %v451 = vpop.permute.xlu0 %450
        %452 = vrot.lane.b32.xlu0 %v447, 127
        %v453 = vpop.permute.xlu0 %452
        %vm454 = vcmp.lt.s32.totalorder %v338, 127
        %v455 = vsel %vm454, %v451, %v453
        %v456 = vsel %vm454, %v453, %v451
        %s457 = scalar_lea.vmem [#allocation6], 5
        %v458 = vld [vmem:[%s457] ss:$8 sm:$0x3]
        %v460 = vperm.slane %v458, 0
        %v461 = vperm.slane %v458, 1
        %v464 = vmul.f32 %v455, %v460
        %v465 = vmul.f32 %v456, %v461
        %v466 = vpack.c.bf16 %v465, %v464
        %v468 = vrot.slane %v466, 6
        %470 = vst [vmem:[#allocation2 + $0x10] sm:$0xcc] %v468
        %471 = vst [vmem:[#allocation1] ss:$2 sm:$0xff] %v326
        %v472 = vld.sshfl [vmem:[#allocation1] sm:$0xff pattern:$0x75316420]
        %v473 = vld.sshfl [vmem:[#allocation1 + $0x8] sm:$0xff pattern:$0x75316420]
        %476 = vrot.lane.b32.xlu0 %v472, 113
        %v477 = vpop.permute.xlu0 %476
        %478 = vrot.lane.b32.xlu0 %v473, 113
        %v479 = vpop.permute.xlu0 %478
        %vm480 = vcmp.lt.s32.totalorder %v338, 113
        %v481 = vsel %vm480, %v477, %v479
        %v482 = vsel %vm480, %v479, %v477
        %s483 = scalar_lea.vmem [#allocation6], 6
        %v484 = vld [vmem:[%s483] ss:$8 sm:$0x3]
        %v486 = vperm.slane %v484, 0
        %v487 = vperm.slane %v484, 1
        %v490 = vmul.f32 %v481, %v486
        %v491 = vmul.f32 %v482, %v487
        %v492 = vpack.c.bf16 %v491, %v490
        %493 = vst [vmem:[#allocation2 + $0x18] sm:$0x33] %v492
        %494 = vst [vmem:[#allocation1] ss:$2 sm:$0xff] %v326
        %v495 = vld.sshfl [vmem:[#allocation1] sm:$0xff pattern:$0x75316420]
        %v496 = vld.sshfl [vmem:[#allocation1 + $0x8] sm:$0xff pattern:$0x75316420]
        %499 = vrot.lane.b32.xlu0 %v495, 112
        %v500 = vpop.permute.xlu0 %499
        %501 = vrot.lane.b32.xlu0 %v496, 112
        %v502 = vpop.permute.xlu0 %501
        %vm503 = vcmp.lt.s32.totalorder %v338, 112
        %v504 = vsel %vm503, %v500, %v502
        %v505 = vsel %vm503, %v502, %v500
        %s506 = scalar_lea.vmem [#allocation6], 7
        %v507 = vld [vmem:[%s506] ss:$8 sm:$0x3]
        %v509 = vperm.slane %v507, 0
        %v510 = vperm.slane %v507, 1
        %v513 = vmul.f32 %v504, %v509
        %v514 = vmul.f32 %v505, %v510
        %v515 = vpack.c.bf16 %v514, %v513
        %v517 = vrot.slane %v515, 6
        %519 = vst [vmem:[#allocation2 + $0x18] sm:$0xcc] %v517
        %520 = vst [vmem:[#allocation1] ss:$2 sm:$0xff] %v326
        %v521 = vld.sshfl [vmem:[#allocation1] sm:$0xff pattern:$0x75316420]
        %v522 = vld.sshfl [vmem:[#allocation1 + $0x8] sm:$0xff pattern:$0x75316420]
        %525 = vrot.lane.b32.xlu0 %v521, 111
        %v526 = vpop.permute.xlu0 %525
        %527 = vrot.lane.b32.xlu0 %v522, 111
        %v528 = vpop.permute.xlu0 %527
        %vm529 = vcmp.lt.s32.totalorder %v338, 111
        %v530 = vsel %vm529, %v526, %v528
        %v531 = vsel %vm529, %v528, %v526
        %s532 = scalar_lea.vmem [#allocation6], 16
        %v533 = vld [vmem:[%s532] ss:$8 sm:$0x3]
        %v535 = vperm.slane %v533, 0
        %v536 = vperm.slane %v533, 1
        %v539 = vmul.f32 %v530, %v535
        %v540 = vmul.f32 %v531, %v536
        %v541 = vpack.c.bf16 %v540, %v539
        %542 = vst [vmem:[#allocation2 + $0x20] sm:$0x33] %v541
        %v543 = vld [vmem:[%s2] sm:$0x3]
        %v544 = vld [vmem:[#allocation2] sm:$0xff]
        %v545 = vld [vmem:[#allocation2 + $0x8] sm:$0xff]
        %v546 = vld [vmem:[#allocation2 + $0x10] sm:$0xff]
        %v547 = vld [vmem:[#allocation2 + $0x18] sm:$0xff]
        %v548 = vld [vmem:[#allocation2 + $0x20] sm:$0x33]
        %v549 = vld [vmem:[%s3] sm:$0xf]
        %551 = vset.pattern.permute.xlu0 0
        %552 = vperm.xlu0 %551, %v549
        %v553 = vpop.permute.xlu0 %552
        %v560 = vunpack.c.l.b16 %v544
        %v561 = vunpack.c.h.b16 %v544
        %v562 = vunpack.c.l.b16 %v545
        %v563 = vunpack.c.h.b16 %v545
        %v564 = vunpack.c.l.b16 %v546
        %v565 = vunpack.c.h.b16 %v546
        %v566 = vunpack.c.l.b16 %v547
        %v567 = vunpack.c.h.b16 %v547
        %v568 = vunpack.c.l.b16 %v548
        %v569 = vunpack.c.h.b16 %v548
        %v570 = vpack.c.b16 %v562, %v560
        %v571 = vpack.c.b16 %v563, %v561
        %v572 = vpack.c.b16 %v566, %v564
        %v573 = vpack.c.b16 %v567, %v565
        %v574 = vpack.c.b16 %v568, %v568
        %v575 = vpack.c.b16 %v569, %v569
        %vm580 = vcmask 293888
        %v582 = vsel %vm580, %v543, 0
        %vm584 = vcmask 1041408
        %v586 = vsel %vm584, %v574, 0
        %v589 = vsel %vm584, %v575, 0
        %591 = vmatpush.bf16.msra.mxu0 0
        %592 = vmatpush.bf16.msra.mxu0 0
        %593 = vmatpush.bf16.msra.mxu0 0
        %594 = vmatpush.bf16.msra.mxu0 0
        %595 = vmatpush.bf16.msra.mxu0 0
        %596 = vmatpush.bf16.msra.mxu0 %v586
        %597 = vmatpush.bf16.msra.mxu0 %v572
        %598 = vmatpush.bf16.msra.mxu0 %v570
        %599 = vmatmul.bf16.gmra.mxu0 %v582
        %v600 = vpop.f32.mrf.mxu0
        %v601 = vadd.f32 %v553, %v600
        %v602 = vpop.f32.mrf.mxu0
        %603 = vdwg.mxu0
        %604 = vmatpush.bf16.msra.mxu0 0
        %605 = vmatpush.bf16.msra.mxu0 0
        %606 = vmatpush.bf16.msra.mxu0 0
        %607 = vmatpush.bf16.msra.mxu0 0
        %608 = vmatpush.bf16.msra.mxu0 0
        %609 = vmatpush.bf16.msra.mxu0 %v589
        %610 = vmatpush.bf16.msra.mxu0 %v573
        %611 = vmatpush.bf16.msra.mxu0 %v571
        %612 = vmatmul.bf16.gmra.mxu0 %v582
        %v613 = vpop.f32.mrf.mxu0
        %v614 = vadd.f32 %v553, %v613
        %v615 = vpop.f32.mrf.mxu0
        %616 = vdwg.mxu0
        %v617 = vmax.f32 %v601, 0.0
        %v618 = vmax.f32 %v614, 0.0
        %v621 = vrot.slane %v618, 4
        %v622 = vsel %vm433, %v617, %v621
        %624 = vst [vmem:[%s324] sm:$0xff] %v622
        %625 = vrot.lane.b32.xlu0 %v617, 17
        %v626 = vpop.permute.xlu0 %625
        %627 = vrot.lane.b32.xlu0 %v618, 17
        %v628 = vpop.permute.xlu0 %627
        %v629 = vsel %vm339, %v626, %v628
        %v630 = vsel %vm339, %v628, %v626
        %v631 = vld [vmem:[#allocation6] ss:$8 sm:$0x3]
        %v633 = vperm.slane %v631, 0
        %v634 = vperm.slane %v631, 1
        %v637 = vmul.f32 %v630, %v633
        %v638 = vmul.f32 %v629, %v634
        %v639 = vpack.c.bf16 %v638, %v637
        %640 = vst [vmem:[#allocation2] sm:$0x33] %v639
        %641 = vrot.lane.b32.xlu0 %v617, 16
        %v642 = vpop.permute.xlu0 %641
        %643 = vrot.lane.b32.xlu0 %v618, 16
        %v644 = vpop.permute.xlu0 %643
        %v645 = vsel %vm361, %v642, %v644
        %v646 = vsel %vm361, %v644, %v642
        %v647 = vld [vmem:[%s364] ss:$8 sm:$0x3]
        %v649 = vperm.slane %v647, 0
        %v650 = vperm.slane %v647, 1
        %v653 = vmul.f32 %v646, %v649
        %v654 = vmul.f32 %v645, %v650
        %v655 = vpack.c.bf16 %v654, %v653
        %v657 = vrot.slane %v655, 6
        %659 = vst [vmem:[#allocation2] sm:$0xcc] %v657
        %660 = vrot.lane.b32.xlu0 %v617, 15
        %v661 = vpop.permute.xlu0 %660
        %662 = vrot.lane.b32.xlu0 %v618, 15
        %v663 = vpop.permute.xlu0 %662
        %v664 = vsel %vm387, %v661, %v663
        %v665 = vsel %vm387, %v663, %v661
        %v666 = vld [vmem:[%s390] ss:$8 sm:$0x3]
        %v668 = vperm.slane %v666, 0
        %v669 = vperm.slane %v666, 1
        %v672 = vmul.f32 %v665, %v668
        %v673 = vmul.f32 %v664, %v669
        %v674 = vpack.c.bf16 %v673, %v672
        %675 = vst [vmem:[#allocation2 + $0x8] sm:$0x33] %v674
        %676 = vrot.lane.b32.xlu0 %v617, 1
        %v677 = vpop.permute.xlu0 %676
        %678 = vrot.lane.b32.xlu0 %v618, 1
        %v679 = vpop.permute.xlu0 %678
        %v680 = vsel %vm410, %v677, %v679
        %v681 = vsel %vm410, %v679, %v677
        %v682 = vld [vmem:[%s413] ss:$8 sm:$0x3]
        %v684 = vperm.slane %v682, 0
        %v685 = vperm.slane %v682, 1
        %v688 = vmul.f32 %v681, %v684
        %v689 = vmul.f32 %v680, %v685
        %v690 = vpack.c.bf16 %v689, %v688
        %v692 = vrot.slane %v690, 6
        %694 = vst [vmem:[#allocation2 + $0x8] sm:$0xcc] %v692
        %v695 = vld [vmem:[%s427] ss:$8 sm:$0x3]
        %v697 = vperm.slane %v695, 0
        %v698 = vperm.slane %v695, 1
        %v701 = vmul.f32 %v617, %v697
        %v702 = vmul.f32 %v618, %v698
        %v703 = vpack.c.bf16 %v702, %v701
        %704 = vst [vmem:[#allocation2 + $0x10] sm:$0x33] %v703
        %705 = vrot.lane.b32.xlu0 %v617, 127
        %v706 = vpop.permute.xlu0 %705
        %707 = vrot.lane.b32.xlu0 %v618, 127
        %v708 = vpop.permute.xlu0 %707
        %v709 = vsel %vm454, %v706, %v708
        %v710 = vsel %vm454, %v708, %v706
        %v711 = vld [vmem:[%s457] ss:$8 sm:$0x3]
        %v713 = vperm.slane %v711, 0
        %v714 = vperm.slane %v711, 1
        %v717 = vmul.f32 %v709, %v713
        %v718 = vmul.f32 %v710, %v714
        %v719 = vpack.c.bf16 %v718, %v717
        %v721 = vrot.slane %v719, 6
        %723 = vst [vmem:[#allocation2 + $0x10] sm:$0xcc] %v721
        %724 = vrot.lane.b32.xlu0 %v617, 113
        %v725 = vpop.permute.xlu0 %724
        %726 = vrot.lane.b32.xlu0 %v618, 113
        %v727 = vpop.permute.xlu0 %726
        %v728 = vsel %vm480, %v725, %v727
        %v729 = vsel %vm480, %v727, %v725
        %v730 = vld [vmem:[%s483] ss:$8 sm:$0x3]
        %v732 = vperm.slane %v730, 0
        %v733 = vperm.slane %v730, 1
        %v736 = vmul.f32 %v728, %v732
        %v737 = vmul.f32 %v729, %v733
        %v738 = vpack.c.bf16 %v737, %v736
        %739 = vst [vmem:[#allocation2 + $0x18] sm:$0x33] %v738
        %740 = vrot.lane.b32.xlu0 %v617, 112
        %v741 = vpop.permute.xlu0 %740
        %742 = vrot.lane.b32.xlu0 %v618, 112
        %v743 = vpop.permute.xlu0 %742
        %v744 = vsel %vm503, %v741, %v743
        %v745 = vsel %vm503, %v743, %v741
        %v746 = vld [vmem:[%s506] ss:$8 sm:$0x3]
        %v748 = vperm.slane %v746, 0
        %v749 = vperm.slane %v746, 1
        %v752 = vmul.f32 %v744, %v748
        %v753 = vmul.f32 %v745, %v749
        %v754 = vpack.c.bf16 %v753, %v752
        %v756 = vrot.slane %v754, 6
        %758 = vst [vmem:[#allocation2 + $0x18] sm:$0xcc] %v756
        %759 = vrot.lane.b32.xlu0 %v617, 111
        %v760 = vpop.permute.xlu0 %759
        %761 = vrot.lane.b32.xlu0 %v618, 111
        %v762 = vpop.permute.xlu0 %761
        %v763 = vsel %vm529, %v760, %v762
        %v764 = vsel %vm529, %v762, %v760
        %v765 = vld [vmem:[%s532] ss:$8 sm:$0x3]
        %v767 = vperm.slane %v765, 0
        %v768 = vperm.slane %v765, 1
        %v771 = vmul.f32 %v763, %v767
        %v772 = vmul.f32 %v764, %v768
        %v773 = vpack.c.bf16 %v772, %v771
        %774 = vst [vmem:[#allocation2 + $0x20] sm:$0x33] %v773
        %v775 = vld [vmem:[%s4] sm:$0x3]
        %v776 = vld [vmem:[#allocation2] sm:$0xff]
        %v777 = vld [vmem:[#allocation2 + $0x8] sm:$0xff]
        %v778 = vld [vmem:[#allocation2 + $0x10] sm:$0xff]
        %v779 = vld [vmem:[#allocation2 + $0x18] sm:$0xff]
        %v780 = vld [vmem:[#allocation2 + $0x20] sm:$0x33]
        %v781 = vld [vmem:[%s5] sm:$0xf]
        %783 = vset.pattern.permute.xlu0 0
        %784 = vperm.xlu0 %783, %v781
        %v785 = vpop.permute.xlu0 %784
        %v792 = vunpack.c.l.b16 %v776
        %v793 = vunpack.c.h.b16 %v776
        %v794 = vunpack.c.l.b16 %v777
        %v795 = vunpack.c.h.b16 %v777
        %v796 = vunpack.c.l.b16 %v778
        %v797 = vunpack.c.h.b16 %v778
        %v798 = vunpack.c.l.b16 %v779
        %v799 = vunpack.c.h.b16 %v779
        %v800 = vunpack.c.l.b16 %v780
        %v801 = vunpack.c.h.b16 %v780
        %v802 = vpack.c.b16 %v794, %v792
        %v803 = vpack.c.b16 %v795, %v793
        %v804 = vpack.c.b16 %v798, %v796
        %v805 = vpack.c.b16 %v799, %v797
        %v806 = vpack.c.b16 %v800, %v800
        %v807 = vpack.c.b16 %v801, %v801
        %v813 = vsel %vm580, %v775, 0
        %v816 = vsel %vm584, %v806, 0
        %v819 = vsel %vm584, %v807, 0
        %821 = vmatpush.bf16.msra.mxu0 0
        %822 = vmatpush.bf16.msra.mxu0 0
        %823 = vmatpush.bf16.msra.mxu0 0
        %824 = vmatpush.bf16.msra.mxu0 0
        %825 = vmatpush.bf16.msra.mxu0 0
        %826 = vmatpush.bf16.msra.mxu0 %v816
        %827 = vmatpush.bf16.msra.mxu0 %v804
        %828 = vmatpush.bf16.msra.mxu0 %v802
        %829 = vmatmul.bf16.gmra.mxu0 %v813
        %v830 = vpop.f32.mrf.mxu0
        %v831 = vadd.f32 %v785, %v830
        %v832 = vpop.f32.mrf.mxu0
        %833 = vdwg.mxu0
        %834 = vmatpush.bf16.msra.mxu0 0
        %835 = vmatpush.bf16.msra.mxu0 0
        %836 = vmatpush.bf16.msra.mxu0 0
        %837 = vmatpush.bf16.msra.mxu0 0
        %838 = vmatpush.bf16.msra.mxu0 0
        %839 = vmatpush.bf16.msra.mxu0 %v819
        %840 = vmatpush.bf16.msra.mxu0 %v805
        %841 = vmatpush.bf16.msra.mxu0 %v803
        %842 = vmatmul.bf16.gmra.mxu0 %v813
        %v843 = vpop.f32.mrf.mxu0
        %v844 = vadd.f32 %v785, %v843
        %v845 = vpop.f32.mrf.mxu0
        %846 = vdwg.mxu0
        %v847 = vld [vmem:[%s283] sm:$0xff]
        %v850 = vrot.slane %v844, 4
        %v851 = vsel %vm433, %v831, %v850
        %v853 = vadd.f32 %v847, %v851
        %854 = vst [vmem:[%s317] sm:$0xff] %v853
        %s855 = sand.u32 %s168, 1
        %s856 = scalar_lea.sflag [#allocation5], %s855
        %s857 = sand.u32 %s168, 1
        %s858 = smul.addr %s857, 8
        %s859 = scalar_lea.vmem [#allocation8], %s858
        %s860 = sand.u32 %s194, 1
        %s861 = scalar_lea.sflag [#allocation10], %s860
        %s862 = sand.u32 %s194, 1
        %s863 = smul.addr %s862, 8
        %s864 = scalar_lea.vmem [#allocation9], %s863
        // Predicated region
        $region53: #{tpu_custom_call.1} parent=43 // pred_check
          %p865 = pneg %p178
        $region54: #{tpu_custom_call.1} parent=43 // pred_check_branch
          %867 = sbr.rel (%p865) target = $region56
        $region55: #{tpu_custom_call.1} parent=43 // pred_region
          %869 = vsyncadd %s856, 0
          %s870 = smul.addr %s29, 2
          %s871 = smul.addr %s870, 4
          %s872 = scalar_lea.hbm %s6, %s871
          %s874 = sshll.u32 %s859, 4
          %s875 = int_to_ptr.vmem [resolvable:$true] %s874
          %s876 = sshll.u32 %s872, 4
          %s877 = int_to_ptr.hbm [resolvable:$true] %s876
          %879 = dma.vmem_to_hbm [thread:$0]  %s875, 128, %s877, %s856
        $region56: #{tpu_custom_call.1} parent=43 // pred_fallthru
          _
        // Predicated region
        $region57: #{tpu_custom_call.1} parent=43 // pred_check
          %p880 = pneg %p204
        $region58: #{tpu_custom_call.1} parent=43 // pred_check_branch
          %882 = sbr.rel (%p880) target = $region60
        $region59: #{tpu_custom_call.1} parent=43 // pred_region
          %884 = vsyncadd %s861, 0
          %s885 = smul.addr %s29, 2
          %s886 = smul.addr %s885, 4
          %s887 = scalar_lea.hbm %s7, %s886
          %s889 = sshll.u32 %s864, 4
          %s890 = int_to_ptr.vmem [resolvable:$true] %s889
          %s891 = sshll.u32 %s887, 4
          %s892 = int_to_ptr.hbm [resolvable:$true] %s891
          %894 = dma.vmem_to_hbm [thread:$0]  %s890, 128, %s892, %s861
        $region60: #{tpu_custom_call.1} parent=43 // pred_fallthru
          _
      $region44: #{tpu_custom_call.1} parent=5 // pred_fallthru
        _
      %p895 = scmp.le.s32.totalorder 2, %s24
      // Predicated region
      $region61: #{tpu_custom_call.1} parent=5 // pred_check
        %p896 = pneg %p895
      $region62: #{tpu_custom_call.1} parent=5 // pred_check_branch
        %898 = sbr.rel (%p896) target = $region64
      $region63: #{tpu_custom_call.1} parent=5 // pred_region
        %s899 = ssub.s32 %s24, 2
        // Predicated region
        $region65: #{tpu_custom_call.1} parent=63 // pred_check
          %p900 = pneg %p184
        $region66: #{tpu_custom_call.1} parent=63 // pred_check_branch
          %902 = sbr.rel (%p900) target = $region68
        $region67: #{tpu_custom_call.1} parent=63 // pred_region
          %s903 = sand.u32 %s169, 1
          %s904 = scalar_lea.sflag [#allocation5], %s903
          %s905 = sand.u32 %s169, 1
          %s906 = smul.addr %s905, 8
          %s907 = scalar_lea.vmem [#allocation8], %s906
          %909 = dma.done %s904, 128
        $region68: #{tpu_custom_call.1} parent=63 // pred_fallthru
          _
        // Predicated region
        $region69: #{tpu_custom_call.1} parent=63 // pred_check
          %p910 = pneg %p210
        $region70: #{tpu_custom_call.1} parent=63 // pred_check_branch
          %912 = sbr.rel (%p910) target = $region72
        $region71: #{tpu_custom_call.1} parent=63 // pred_region
          %s913 = sand.u32 %s195, 1
          %s914 = scalar_lea.sflag [#allocation10], %s913
          %s915 = sand.u32 %s195, 1
          %s916 = smul.addr %s915, 8
          %s917 = scalar_lea.vmem [#allocation9], %s916
          %919 = dma.done %s914, 128
        $region72: #{tpu_custom_call.1} parent=63 // pred_fallthru
          _
      $region64: #{tpu_custom_call.1} parent=5 // pred_fallthru
        _
    $region6: #{tpu_custom_call.1} parent=1 // loop_footer
      %s28 = sadd.s32 1, %s24
    $region7: #{tpu_custom_call.1} parent=1 // loop_footer_branch
      %23 = sbr.rel target = $region3
    $region8: #{tpu_custom_call.1} parent=1 // loop_exit
      _
    %920 = vsyncpa [#allocation4], 1
    %s921 = scalar_lea.sflag [#allocation4], 1
    %922 = vsyncpa %s921, 1
    %923 = vsyncpa [#allocation7], 1
    %924 = vsyncpa [#allocation5], 1
    %s925 = scalar_lea.sflag [#allocation5], 1
    %926 = vsyncpa %s925, 1
    %927 = vsyncpa [#allocation10], 1
    %s928 = scalar_lea.sflag [#allocation10], 1
    %929 = vsyncpa %s928, 1

</llo_original>
